<compile_context>
chip_gen: v7x
topology: tpu7x:2x2x1
jax: 0.10.0
libtpu: 0.0.40
codegen_flags: <defaults>
</compile_context>

<pallas_src>
import math

import numpy as np
import jax
import jax.numpy as jnp
from jax import lax
from jax.experimental import pallas as pl
from jax.experimental.pallas import tpu as pltpu

_VMEM_BUDGET_BYTES = 12 * 1024 * 1024   # under every chip's default scoped VMEM


def _patch_embed_kernel(x_ref, w_ref, pe_ref, o_ref):
    # x_ref:  (TILE_M, K)   rows = flattened (sample, patch), K = 3*patch_len
    # w_ref:  (K, Dp)       VMEM-resident conv weight (flattened taps)
    # pe_ref: (TILE_M, Dp)  VMEM-resident positional embedding (f32, pre-tiled)
    # o_ref:  (TILE_M, Dp)
    acc = jnp.dot(x_ref[...], w_ref[...], preferred_element_type=jnp.float32)
    acc = acc + pe_ref[...]
    o_ref[...] = acc.astype(o_ref.dtype)


def _positional_embedding(num_pos, d_model):
    # Faithful to torch PositionalEmbedding (odd d_model handled by +1 then slice).
    d_raw = d_model
    d = d_model + (d_model % 2)
    position = jnp.arange(num_pos, dtype=jnp.float32)[:, None]
    div_term = jnp.exp(
        jnp.arange(0, d, 2, dtype=jnp.float32) * (-math.log(10000.0) / d))
    ang = position * div_term                        # [num_pos, d//2]
    pe = jnp.zeros((num_pos, d), dtype=jnp.float32)
    pe = pe.at[:, 0::2].set(jnp.sin(ang))
    pe = pe.at[:, 1::2].set(jnp.cos(ang))
    return pe[:, :d_raw]


def _sublane_multiple(*dtypes):
    # f32 -> 8, bf16 -> 16, int8/fp8 -> 32 rows per packed vreg sublane group.
    return max(8, *(32 // jnp.dtype(d).itemsize for d in dtypes))


def _vmem_bytes(tile_m, K, Dp, c_item, o_item):
    # LHS lanes pad to 128 regardless of K; in/out double-buffered, PE resident.
    k_lanes = -(-K // 128) * 128
    lhs = 2 * tile_m * k_lanes * c_item
    out = 2 * tile_m * Dp * o_item
    pe = tile_m * Dp * 4
    w = 2 * (-(-K // 8) * 8) * Dp * c_item
    return lhs + out + pe + w


def _choose_tile_n(num_patches, n_samples, sublane, target_rows=1024):
    """Samples per tile: tile_m = tile_n*P is a multiple of `sublane`, grown
    toward ~target_rows, but capped so there are >= 2 grid steps whenever there
    is enough work to split (v7x: shard across both TensorCores)."""
    base = sublane // math.gcd(num_patches, sublane)
    max_tile_n = base * (-(-n_samples // base))
    tile_n = base
    while ((tile_n + base) * num_patches <= target_rows
           and tile_n + base <= max_tile_n):
        tile_n += base
    if max_tile_n >= 2 * base:
        half = base * (-(-max_tile_n // (2 * base)))
        tile_n = min(tile_n, half)
    return tile_n, base


def patch_embedding(x, conv_weight, patch_len, stride, *,
                    compute_dtype=None, out_dtype=None):
    """
    x:           [B, C, L]            (batch, n_channel, seq_len)
    conv_weight: [D, patch_len, 3]    torch Conv1d weight (out, in, kW), no bias
    compute_dtype: optional narrower matmul operand dtype (e.g. jnp.bfloat16);
                   accumulation is always f32.
    returns (x_embed [B*C, P, D], n_channel)
    """
    B, C, L = x.shape
    D = conv_weight.shape[0]
    c_dtype = jnp.dtype(compute_dtype) if compute_dtype is not None else x.dtype
    o_dtype = jnp.dtype(out_dtype) if out_dtype is not None else x.dtype

    Lp = L + stride
    P = (Lp - patch_len) // stride + 1
    K = 3 * patch_len
    Dp = -(-D // 128) * 128            # lane-dense (unmasked) output stores
    N = B * C

    # ---- tiling --------------------------------------------------------------
    sublane = _sublane_multiple(c_dtype, o_dtype)
    tile_n, base = _choose_tile_n(P, N, sublane)
    c_item = jnp.dtype(c_dtype).itemsize
    o_item = jnp.dtype(o_dtype).itemsize
    while (tile_n > base
           and _vmem_bytes(tile_n * P, K, Dp, c_item, o_item) > _VMEM_BUDGET_BYTES):
        tile_n -= base
    tile_m = tile_n * P
    n_pad = -(-N // tile_n) * tile_n
    m_pad = n_pad * P

    # ---- single-gather glue (cheap vs the Dp-wide output) ---------------------
    # idx3[p] = concat(window((p-1)%P), window(p), window((p+1)%P)) indices into
    # the replication-padded sequence: replication pad + unfold + circular conv
    # taps are all encoded in ONE gather.
    x2 = x.reshape(N, L)
    x2 = jnp.pad(x2, ((0, n_pad - N), (0, stride)), mode="edge")
    pos = np.arange(P)
    win = pos[:, None] * stride + np.arange(patch_len)[None, :]        # [P, PL]
    idx3 = np.concatenate(
        [win[(pos - 1) % P], win, win[(pos + 1) % P]], axis=-1)        # [P, 3*PL]
    x3 = x2[:, idx3].reshape(m_pad, K).astype(c_dtype)                 # one gather

    # weight [D, PL, 3] -> [3*PL, Dp], tap-major (prev, center, next), zero-pad D
    w_flat = jnp.transpose(conv_weight, (2, 1, 0)).reshape(K, D)
    if Dp != D:
        w_flat = jnp.pad(w_flat, ((0, 0), (0, Dp - D)))
    w_flat = w_flat.astype(c_dtype)

    # positional embedding, f32 for accumulation parity, pre-tiled to the
    # sample-aligned row tile (VMEM resident; <= ~2 MiB even for large tiles)
    pe = _positional_embedding(P, D)
    if Dp != D:
        pe = jnp.pad(pe, ((0, 0), (0, Dp - D)))
    pe_tile = jnp.tile(pe, (tile_n, 1))                                # [tile_m, Dp]

    grid = (m_pad // tile_m,)
    cost = pl.CostEstimate(
        flops=2 * m_pad * K * Dp,
        transcendentals=0,
        bytes_accessed=(m_pad * K * c_item + K * Dp * c_item
                        + tile_m * Dp * 4 + m_pad * Dp * o_item),
    )

    out = pl.pallas_call(
        _patch_embed_kernel,
        out_shape=jax.ShapeDtypeStruct((m_pad, Dp), o_dtype),
        grid_spec=pltpu.PrefetchScalarGridSpec(
            num_scalar_prefetch=0,
            grid=grid,
            in_specs=[
                pl.BlockSpec((tile_m, K), lambda i: (i, 0)),
                pl.BlockSpec((K, Dp), lambda i: (0, 0)),        # resident weight
                pl.BlockSpec((tile_m, Dp), lambda i: (0, 0)),   # resident PE tile
            ],
            out_specs=pl.BlockSpec((tile_m, Dp), lambda i: (i, 0)),
        ),
        compiler_params=pltpu.CompilerParams(
            dimension_semantics=("parallel",)),
        cost_estimate=cost,
    )(x3, w_flat, pe_tile)

    x_embed = out[: N * P, :D].reshape(N, P, D)
    # TODO(synk): nn.Dropout(p) is identity at inference; training-mode
    # stochastic dropout is not applied here.
    return x_embed, C


if __name__ == "__main__":
    key = jax.random.PRNGKey(0)
    B, C, L = 2, 4, 16
    patch_len, stride, d_model = 8, 4, 128   # lane-dense D (multiple of 128)

    k1, k2 = jax.random.split(key, 2)
    x = jax.random.normal(k1, (B, C, L), dtype=jnp.float32)

    # kaiming_normal_(fan_in, leaky_relu) equivalent init for Conv1d weight
    fan_in = patch_len * 3
    gain = math.sqrt(2.0 / (1.0 + 0.01 ** 2))
    w = (gain / math.sqrt(fan_in)) * jax.random.normal(
        k2, (d_model, patch_len, 3), dtype=jnp.float32)

    out, n_channel = patch_embedding(x, w, patch_len, stride)
    out = jax.block_until_ready(out)

    # ---- pure-JAX reference, torch-faithful path ----------------------------
    xp = jnp.pad(x, ((0, 0), (0, 0), (0, stride)), mode="edge")
    P = (L + stride - patch_len) // stride + 1
    idx = jnp.arange(P)[:, None] * stride + jnp.arange(patch_len)[None, :]
    patches = xp[:, :, idx].reshape(B * C, P, patch_len)
    inp = jnp.transpose(patches, (0, 2, 1))                       # [N, PL, P]
    inp_c = jnp.concatenate([inp[:, :, -1:], inp, inp[:, :, :1]], axis=-1)
    ve = lax.conv_general_dilated(
        inp_c, w, window_strides=(1,), padding="VALID",
        dimension_numbers=("NCH", "OIH", "NCH"))                  # [N, D, P]
    ve = jnp.transpose(ve, (0, 2, 1))                             # [N, P, D]
    ref = ve + _positional_embedding(P, d_model)[None]

    assert n_channel == C
    assert out.shape == (B * C, P, d_model)
    assert jnp.allclose(out, ref, atol=1e-4, rtol=1e-4), float(
        jnp.max(jnp.abs(out - ref)))
    print("KERNEL_OK")
</pallas_src>

<mosaic_0001>
module attributes {stable_mosaic.version = 11 : i64} {
  func.func @_patch_embed_kernel(%arg0: i32, %arg1: memref<16x24xf32, #tpu.memory_space<vmem>>, %arg2: memref<24x128xf32, #tpu.memory_space<vmem>>, %arg3: memref<16x128xf32, #tpu.memory_space<vmem>>, %arg4: memref<16x128xf32, #tpu.memory_space<vmem>>) attributes {dimension_semantics = [#tpu.dimension_semantics<parallel>], iteration_bounds = array<i64: 2>, scalar_prefetch = 0 : i64, scratch_operands = 0 : i64, tpu.core_type = #tpu.core_type<tc>, window_params = [{transform_indices = @transform_0, window_bounds = array<i64: 16, 24>}, {pipeline_mode = #tpu.pipeline_mode<synchronous>, transform_indices = @transform_1, window_bounds = array<i64: 24, 128>}, {pipeline_mode = #tpu.pipeline_mode<synchronous>, transform_indices = @transform_2, window_bounds = array<i64: 16, 128>}, {transform_indices = @transform_3, window_bounds = array<i64: 16, 128>}]} {
    %c0 = arith.constant 0 : index
    %c0_0 = arith.constant 0 : index
    %0 = vector.load %arg1[%c0, %c0_0] : memref<16x24xf32, #tpu.memory_space<vmem>>, vector<16x24xf32>
    %c0_1 = arith.constant 0 : index
    %c0_2 = arith.constant 0 : index
    %1 = vector.load %arg2[%c0_1, %c0_2] : memref<24x128xf32, #tpu.memory_space<vmem>>, vector<24x128xf32>
    %cst = arith.constant dense<0.000000e+00> : vector<16x128xf32>
    %2 = tpu.matmul %0, %1, %cst {dimension_numbers = #tpu.dot_dimension_numbers<[1], [0], [0], [1], [0, 0, 1, 1], [], []>} : vector<16x24xf32>, vector<24x128xf32>, vector<16x128xf32> -> vector<16x128xf32>
    %c0_3 = arith.constant 0 : index
    %c0_4 = arith.constant 0 : index
    %3 = vector.load %arg3[%c0_3, %c0_4] : memref<16x128xf32, #tpu.memory_space<vmem>>, vector<16x128xf32>
    %4 = arith.addf %2, %3 : vector<16x128xf32>
    %c0_5 = arith.constant 0 : index
    %c0_6 = arith.constant 0 : index
    %5 = vector.load %arg4[%c0_5, %c0_6] : memref<16x128xf32, #tpu.memory_space<vmem>>, vector<16x128xf32>
    tpu.vector_store %arg4[%c0_5, %c0_6], %4 {strides = array<i32>} : memref<16x128xf32, #tpu.memory_space<vmem>>, vector<16x128xf32>,
    return
  }
  func.func @transform_0(%arg0: i32) -> (i32, i32) {
    %c0_i32 = arith.constant 0 : i32
    %c0_i32_0 = arith.constant 0 : i32
    return %arg0, %c0_i32 : i32, i32
  }
  func.func @transform_1(%arg0: i32) -> (i32, i32) {
    %c0_i32 = arith.constant 0 : i32
    %c0_i32_0 = arith.constant 0 : i32
    %c0_i32_1 = arith.constant 0 : i32
    return %c0_i32, %c0_i32_0 : i32, i32
  }
  func.func @transform_2(%arg0: i32) -> (i32, i32) {
    %c0_i32 = arith.constant 0 : i32
    %c0_i32_0 = arith.constant 0 : i32
    %c0_i32_1 = arith.constant 0 : i32
    return %c0_i32, %c0_i32_0 : i32, i32
  }
  func.func @transform_3(%arg0: i32) -> (i32, i32) {
    %c0_i32 = arith.constant 0 : i32
    %c0_i32_0 = arith.constant 0 : i32
    return %arg0, %c0_i32 : i32, i32
  }
}

</mosaic_0001>

<llo_original>
// kernel: tpu_custom_call.1
$region0: #{tpu_custom_call.1}
  #allocation0 [shape = 'u32[]', space=smem, size = 0x4, offset = 0x4, fixed_abs, tag = 'smem constant byte address 0x4 - core index']
  #allocation1 [shape = 'u32[144,128]{1,0:T(1,128)}', space=vmem, size = 0x12000, scoped, tag = 'internal scratch']
  %s0 = inlined_call_operand.vmem [shape: f32[32,24], index: 0, kind: input, shape index: {}]
  %s1 = inlined_call_operand.vmem [shape: f32[24,128], index: 1, kind: input, shape index: {}]
  %s2 = inlined_call_operand.vmem [shape: f32[16,128], index: 2, kind: input, shape index: {}]
  %s3 = inlined_call_operand.hbm [shape: f32[32,128], index: 3, kind: output, shape index: {}]
  %s4 = sld [smem:[#allocation0]]
  $region45: #{tpu_custom_call.1} parent=0
    _
  %s6 = ssub.s32 1, %s4
  %s7 = scalar_select 0, %s6, %s4
  $region1: #{tpu_custom_call.1} parent=0
    #allocation2 [shape = 'u8[16384]{0}', space=vmem, size = 0x4000, scoped, tag = 'output window, operand 0']
    #allocation3 [shape = 's32[2]{0}', space=sflag, size = 0x8, scoped, tag = 'scoped memory for tpu_custom_call.1']
    %8 = vsyncpa [#allocation3], 0
    %s9 = scalar_lea.sflag [#allocation3], 1
    %10 = vsyncpa %s9, 0
    loop: start=0, step=1, limit=4
    $region2: #{tpu_custom_call.1} parent=1 // loop_pre_header
      _
    $region3: #{tpu_custom_call.1} parent=1 // loop_header
      %s12 = sphi 0, %s16
      %p13 = scmp.ge.s32.totalorder %s12, 4
      %s22 = sphi 0, %s24
      %s25 = sphi 0, %s22
      %s26 = sphi 0, %s25
      %s42 = sphi 0, %s26
      %s46 = sphi 0, %s46
      %s48 = sphi 0, %s46
      %s49 = sphi 0, %s48
      %s63 = sphi 0, %s49
      %s67 = sphi 0, %s67
      %s69 = sphi 0, %s67
      %s70 = sphi 0, %s69
      %s84 = sphi 0, %s70
      %s90 = sphi 0, %s92
      %s93 = sphi 0, %s90
      %s94 = sphi 0, %s93
      %s110 = sphi 0, %s94
    $region4: #{tpu_custom_call.1} parent=1 // loop_header_branch
      %15 = sbr.rel (%p13) target = $region8
    $region5: #{tpu_custom_call.1} parent=1 // loop_body
      %s17 = ssub.s32 %s12, 1
      %s18 = ssub.s32 %s12, 2
      %s19 = sadd.s32 %s12, 1
      %s20 = ssub.s32 %s12, %s19
      %p21 = scmp.eq.s32.totalorder %s20, 0
      %s23 = sadd.s32 %s22, 1
      %s24 = scalar_select %p21, %s22, %s23
      %p27 = pneg %p21
      %p28 = scmp.eq.s32.totalorder %s12, 1
      %p29 = por %p27, %p28
      %p30 = scmp.ne.s32.totalorder %s22, %s25
      %p31 = scmp.eq.s32.totalorder %s12, 0
      %p32 = por %p30, %p31
      %p33 = scmp.ne.s32.totalorder %s22, %s25
      %p34 = scmp.eq.s32.totalorder %s17, 1
      %p35 = por %p33, %p34
      %p36 = scmp.ne.s32.totalorder %s25, %s26
      %p37 = scmp.eq.s32.totalorder %s17, 0
      %p38 = por %p36, %p37
      %p39 = scmp.ne.s32.totalorder %s25, %s26
      %p40 = scmp.eq.s32.totalorder %s18, 1
      %p41 = por %p39, %p40
      %p43 = scmp.ne.s32.totalorder %s26, %s42
      %p44 = scmp.eq.s32.totalorder %s18, 0
      %p45 = por %p43, %p44
      %s47 = sadd.s32 %s46, 1
      %p50 = scmp.eq.s32.totalorder %s12, 1
      %p51 = scmp.ne.s32.totalorder %s46, %s48
      %p52 = scmp.eq.s32.totalorder %s12, 0
      %p53 = por %p51, %p52
      %p54 = scmp.ne.s32.totalorder %s46, %s48
      %p55 = scmp.eq.s32.totalorder %s17, 1
      %p56 = por %p54, %p55
      %p57 = scmp.ne.s32.totalorder %s48, %s49
      %p58 = scmp.eq.s32.totalorder %s17, 0
      %p59 = por %p57, %p58
      %p60 = scmp.ne.s32.totalorder %s48, %s49
      %p61 = scmp.eq.s32.totalorder %s18, 1
      %p62 = por %p60, %p61
      %p64 = scmp.ne.s32.totalorder %s49, %s63
      %p65 = scmp.eq.s32.totalorder %s18, 0
      %p66 = por %p64, %p65
      %s68 = sadd.s32 %s67, 1
      %p71 = scmp.eq.s32.totalorder %s12, 1
      %p72 = scmp.ne.s32.totalorder %s67, %s69
      %p73 = scmp.eq.s32.totalorder %s12, 0
      %p74 = por %p72, %p73
      %p75 = scmp.ne.s32.totalorder %s67, %s69
      %p76 = scmp.eq.s32.totalorder %s17, 1
      %p77 = por %p75, %p76
      %p78 = scmp.ne.s32.totalorder %s69, %s70
      %p79 = scmp.eq.s32.totalorder %s17, 0
      %p80 = por %p78, %p79
      %p81 = scmp.ne.s32.totalorder %s69, %s70
      %p82 = scmp.eq.s32.totalorder %s18, 1
      %p83 = por %p81, %p82
      %p85 = scmp.ne.s32.totalorder %s70, %s84
      %p86 = scmp.eq.s32.totalorder %s18, 0
      %p87 = por %p85, %p86
      %s88 = ssub.s32 %s12, %s19
      %p89 = scmp.eq.s32.totalorder %s88, 0
      %s91 = sadd.s32 %s90, 1
      %s92 = scalar_select %p89, %s90, %s91
      %p95 = pneg %p89
      %p96 = scmp.eq.s32.totalorder %s12, 1
      %p97 = por %p95, %p96
      %p98 = scmp.ne.s32.totalorder %s90, %s93
      %p99 = scmp.eq.s32.totalorder %s12, 0
      %p100 = por %p98, %p99
      %p101 = scmp.ne.s32.totalorder %s90, %s93
      %p102 = scmp.eq.s32.totalorder %s17, 1
      %p103 = por %p101, %p102
      %p104 = scmp.ne.s32.totalorder %s93, %s94
      %p105 = scmp.eq.s32.totalorder %s17, 0
      %p106 = por %p104, %p105
      %p107 = scmp.ne.s32.totalorder %s93, %s94
      %p108 = scmp.eq.s32.totalorder %s18, 1
      %p109 = por %p107, %p108
      %p111 = scmp.ne.s32.totalorder %s94, %s110
      %p112 = scmp.eq.s32.totalorder %s18, 0
      %p113 = por %p111, %p112
      %p114 = scmp.le.s32.totalorder 1, %s12
      %p115 = scmp.lt.s32.totalorder %s12, 3
      %p116 = pnand %p114, %p115
      %p117 = pneg %p116
      // Predicated region
      $region9: #{tpu_custom_call.1} parent=5 // pred_check
        _
      $region10: #{tpu_custom_call.1} parent=5 // pred_check_branch
        %119 = sbr.rel (%p116) target = $region12
      $region11: #{tpu_custom_call.1} parent=5 // pred_region
        %s120 = ssub.s32 %s12, 1
        // Predicated region
        $region13: #{tpu_custom_call.1} parent=11 // pred_check
          %p121 = pneg %p59
        $region14: #{tpu_custom_call.1} parent=11 // pred_check_branch
          %123 = sbr.rel (%p121) target = $region16
        $region15: #{tpu_custom_call.1} parent=11 // pred_region
          _
        $region16: #{tpu_custom_call.1} parent=11 // pred_fallthru
          _
        // Predicated region
        $region17: #{tpu_custom_call.1} parent=11 // pred_check
          %p124 = pneg %p80
        $region18: #{tpu_custom_call.1} parent=11 // pred_check_branch
          %126 = sbr.rel (%p124) target = $region20
        $region19: #{tpu_custom_call.1} parent=11 // pred_region
          _
        $region20: #{tpu_custom_call.1} parent=11 // pred_fallthru
          _
      $region12: #{tpu_custom_call.1} parent=5 // pred_fallthru
        _
      %p127 = scmp.lt.s32.totalorder %s12, 2
      // Predicated region
      $region21: #{tpu_custom_call.1} parent=5 // pred_check
        %p128 = pneg %p127
      $region22: #{tpu_custom_call.1} parent=5 // pred_check_branch
        %130 = sbr.rel (%p128) target = $region24
      $region23: #{tpu_custom_call.1} parent=5 // pred_region
        // Predicated region
        $region25: #{tpu_custom_call.1} parent=23 // pred_check
          %p131 = pneg %p32
        $region26: #{tpu_custom_call.1} parent=23 // pred_check_branch
          %133 = sbr.rel (%p131) target = $region28
        $region27: #{tpu_custom_call.1} parent=23 // pred_region
          %s134 = smul.u32 2, %s12
          %p135 = scmp.lt.s32.totalorder %s134, 3
          %s136 = scalar_select %p135, %s134, 3
          %s137 = smul.addr %s136, 8
          %s138 = scalar_lea.vmem %s0, %s137
          %s139 = smul.u32 2, %s12
        $region28: #{tpu_custom_call.1} parent=23 // pred_fallthru
          _
      $region24: #{tpu_custom_call.1} parent=5 // pred_fallthru
        _
      %p140 = scmp.le.s32.totalorder 1, %s12
      %p141 = scmp.lt.s32.totalorder %s12, 3
      %p142 = pnand %p140, %p141
      %p143 = pneg %p142
      // Predicated region
      $region29: #{tpu_custom_call.1} parent=5 // pred_check
        _
      $region30: #{tpu_custom_call.1} parent=5 // pred_check_branch
        %145 = sbr.rel (%p142) target = $region32
      $region31: #{tpu_custom_call.1} parent=5 // pred_region
        %s146 = ssub.s32 %s12, 1
        %s147 = smul.u32 2, %s17
        %p148 = scmp.lt.s32.totalorder %s147, 3
        %s149 = scalar_select %p148, %s147, 3
        %s150 = smul.addr %s149, 8
        %s151 = scalar_lea.vmem %s0, %s150
        %p152 = pneg %p38
        %p153 = pneg %p35
        %p154 = pneg %p59
        %p155 = pneg %p56
        %p156 = pneg %p80
        %p157 = pneg %p77
        %p158 = pneg %p106
        %p159 = pneg %p103
        %s160 = sand.u32 %s93, 1
        %s161 = scalar_lea.sflag [#allocation3], %s160
        %s162 = sand.u32 %s93, 1
        %s163 = smul.addr %s162, 16
        %s164 = scalar_lea.vmem [#allocation2], %s163
        %s165 = smul.u32 2, %s17
        %p166 = scmp.lt.s32.totalorder %s165, 3
        %s167 = scalar_select %p166, %s165, 3
        %s168 = smul.addr %s167, 8
        %s169 = scalar_lea.vmem %s0, %s168
        %s170 = smul.u32 2, %s17
        %s171 = smul.u32 2, %s17
        %v172 = vld [vmem:[%s169] sm:$0xff]
        %v173 = vld [vmem:[%s169 + $0x8] sm:$0xff]
        %v174 = vld [vmem:[%s1] sm:$0xff]
        %v175 = vld [vmem:[%s1 + $0x8] sm:$0xff]
        %v176 = vld [vmem:[%s1 + $0x10] sm:$0xff]
        %v177 = vld [vmem:[%s2] sm:$0xff]
        %v178 = vld [vmem:[%s2 + $0x8] sm:$0xff]
        %vm179 = vcmask 195584
        %v181 = vsel %vm179, %v172, 0
        %v184 = vsel %vm179, %v173, 0
        %186 = vmatprep.subr.mxu0 0.0
        %187 = vmatpush1.msra.mxu0 %v174
        %188 = vmatprep.subr.mxu0 0.0
        %189 = vmatpush1.msra.mxu0 %v175
        %190 = vmatprep.subr.mxu0 0.0
        %191 = vmatpush1.msra.mxu0 %v176
        %192 = vmatprep.subr.mxu0 0.0
        %193 = vmatpush1.msra.mxu0 0.0
        %194 = vmatprep.subr.mxu0 0.0
        %195 = vmatpush1.msra.mxu0 0.0
        %196 = vmatprep.subr.mxu0 0.0
        %197 = vmatpush1.msra.mxu0 0.0
        %198 = vmatprep.subr.mxu0 0.0
        %199 = vmatpush1.msra.mxu0 0.0
        %200 = vmatprep.subr.mxu0 0.0
        %201 = vmatpush1.msra.mxu0 0.0
        %202 = vmatprep.subr.mxu0 0.0
        %203 = vmatpush1.msra.mxu0 0.0
        %204 = vmatprep.subr.mxu0 0.0
        %205 = vmatpush1.msra.mxu0 0.0
        %206 = vmatprep.subr.mxu0 0.0
        %207 = vmatpush1.msra.mxu0 0.0
        %208 = vmatprep.subr.mxu0 0.0
        %209 = vmatpush1.msra.mxu0 0.0
        %210 = vmatprep.subr.mxu0 0.0
        %211 = vmatpush1.msra.mxu0 0.0
        %212 = vmatprep.subr.mxu0 0.0
        %213 = vmatpush1.msra.mxu0 0.0
        %214 = vmatprep.subr.mxu0 0.0
        %215 = vmatpush1.msra.mxu0 0.0
        %216 = vmatprep.subr.mxu0 0.0
        %217 = vmatpush1.msra.mxu0 0.0
        %218 = vmatprep.subr.mxu0 0.0
        %219 = vmatpush1.msra.mxu0 0.0
        %220 = vmatprep.subr.mxu0 0.0
        %221 = vmatpush1.msra.mxu0 0.0
        %222 = vmatprep.subr.mxu0 0.0
        %223 = vmatpush1.msra.mxu0 0.0
        %224 = vmatprep.subr.mxu0 0.0
        %225 = vmatpush1.msra.mxu0 0.0
        %226 = vmatprep.subr.mxu0 0.0
        %227 = vmatpush1.msra.mxu0 0.0
        %228 = vmatprep.subr.mxu0 0.0
        %229 = vmatpush1.msra.mxu0 0.0
        %230 = vmatprep.subr.mxu0 0.0
        %231 = vmatpush1.msra.mxu0 0.0
        %232 = vmatprep.subr.mxu0 0.0
        %233 = vmatpush1.msra.mxu0 0.0
        %234 = vmatprep.subr.mxu0 0.0
        %235 = vmatpush1.msra.mxu0 0.0
        %236 = vmatprep.subr.mxu0 0.0
        %237 = vmatpush1.msra.mxu0 0.0
        %238 = vmatprep.subr.mxu0 0.0
        %239 = vmatpush1.msra.mxu0 0.0
        %240 = vmatprep.subr.mxu0 0.0
        %241 = vmatpush1.msra.mxu0 0.0
        %242 = vmatprep.subr.mxu0 0.0
        %243 = vmatpush1.msra.mxu0 0.0
        %244 = vmatprep.subr.mxu0 0.0
        %245 = vmatpush1.msra.mxu0 0.0
        %246 = vmatprep.subr.mxu0 0.0
        %247 = vmatpush1.msra.mxu0 0.0
        %248 = vmatprep.subr.mxu0 0.0
        %249 = vmatpush1.msra.mxu0 0.0
        %250 = vmatprep.mubr.f32.mxu0 0.0
        %251 = vmatmul.mubr.f32.gmra.mrb[0].mxu0 %v181
        %v252 = vpop.f32.mrb[0].mxu0
        %v253 = vadd.f32 %v177, %v252
        %v254 = vpop.f32.mrb[0].mxu0
        %255 = vmatprep.mubr.f32.mxu0 0.0
        %256 = vmatmul.mubr.f32.gmra.mrb[0].mxu0 %v184
        %v257 = vpop.f32.mrb[0].mxu0
        %v258 = vadd.f32 %v178, %v257
        %v259 = vpop.f32.mrb[0].mxu0
        %260 = vdwg.mxu0
        %261 = vst [vmem:[%s164] sm:$0xff] %v253
        %262 = vst [vmem:[%s164 + $0x8] sm:$0xff] %v258
        %s263 = sand.u32 %s93, 1
        %s264 = scalar_lea.sflag [#allocation3], %s263
        %s265 = sand.u32 %s93, 1
        %s266 = smul.addr %s265, 16
        %s267 = scalar_lea.vmem [#allocation2], %s266
        // Predicated region
        $region33: #{tpu_custom_call.1} parent=31 // pred_check
          %p268 = pneg %p103
        $region34: #{tpu_custom_call.1} parent=31 // pred_check_branch
          %270 = sbr.rel (%p268) target = $region36
        $region35: #{tpu_custom_call.1} parent=31 // pred_region
          %s271 = smul.u32 2, %s17
          %s273 = ssub.s32 256, 256
          %274 = vsyncadd %s264, %s273
          %s275 = smul.addr %s271, 128
          %s276 = scalar_lea.hbm %s3, %s275
          %s277 = sshll.u32 %s267, 4
          %s278 = int_to_ptr.vmem [resolvable:$true] %s277
          %283 = dma.vmem_to_hbm [thread:$0]  %s278, 256, %s276, %s264, 128, 128, 8
        $region36: #{tpu_custom_call.1} parent=31 // pred_fallthru
          _
      $region32: #{tpu_custom_call.1} parent=5 // pred_fallthru
        _
      %p284 = scmp.le.s32.totalorder 2, %s12
      // Predicated region
      $region37: #{tpu_custom_call.1} parent=5 // pred_check
        %p285 = pneg %p284
      $region38: #{tpu_custom_call.1} parent=5 // pred_check_branch
        %287 = sbr.rel (%p285) target = $region40
      $region39: #{tpu_custom_call.1} parent=5 // pred_region
        %s288 = ssub.s32 %s12, 2
        // Predicated region
        $region41: #{tpu_custom_call.1} parent=39 // pred_check
          %p289 = pneg %p109
        $region42: #{tpu_custom_call.1} parent=39 // pred_check_branch
          %291 = sbr.rel (%p289) target = $region44
        $region43: #{tpu_custom_call.1} parent=39 // pred_region
          %s292 = sand.u32 %s94, 1
          %s293 = scalar_lea.sflag [#allocation3], %s292
          %s294 = sand.u32 %s94, 1
          %s295 = smul.addr %s294, 16
          %s296 = scalar_lea.vmem [#allocation2], %s295
          %297 = dma.done %s293, 256
        $region44: #{tpu_custom_call.1} parent=39 // pred_fallthru
          _
      $region40: #{tpu_custom_call.1} parent=5 // pred_fallthru
        _
    $region6: #{tpu_custom_call.1} parent=1 // loop_footer
      %s16 = sadd.s32 1, %s12
    $region7: #{tpu_custom_call.1} parent=1 // loop_footer_branch
      %11 = sbr.rel target = $region3
    $region8: #{tpu_custom_call.1} parent=1 // loop_exit
      _
    %298 = vsyncpa [#allocation3], 1
    %s299 = scalar_lea.sflag [#allocation3], 1
    %300 = vsyncpa %s299, 1

</llo_original>
